<compile_context>
chip_gen: v5e
topology: v5e:2x2
jax: 0.10.0
libtpu: 0.0.40
codegen_flags: <defaults>
</compile_context>

<pallas_src>
import functools
import math

import jax
import jax.numpy as jnp
from jax.experimental import pallas as pl
from jax.experimental.pallas import tpu as pltpu


# ---------------------------------------------------------------------------
# Kernel
# ---------------------------------------------------------------------------
def _make_expand_kernel(n_passes: int):
    """out = x @ E with E a constant 0/1 (bf16) expansion matrix.

    n_passes == 1: x is bf16; one DEFAULT-precision MXU pass (exact).
    n_passes == 3: x is f32/f16; exact 3-way bf16 split, f32 accumulation.

    NOTE: non-finite inputs (Inf/NaN) would propagate across their own output
    row via 0*Inf = NaN in the one-hot matmul (PyTorch nearest keeps them in
    place).  Finite inputs are reproduced bit-exactly.
    """

    def kernel(x_ref, e_ref, o_ref):
        e = e_ref[...]
        if n_passes == 1:
            acc = jnp.dot(x_ref[...], e, preferred_element_type=jnp.float32)
        else:
            xf = x_ref[...].astype(jnp.float32)
            hi = xf.astype(jnp.bfloat16)                       # top 8 mantissa bits
            r1 = xf - hi.astype(jnp.float32)                   # exact residual
            mid = r1.astype(jnp.bfloat16)                      # next 8 bits
            lo = (r1 - mid.astype(jnp.float32)).astype(jnp.bfloat16)  # exact tail
            acc = jnp.dot(hi, e, preferred_element_type=jnp.float32)
            acc = acc + jnp.dot(mid, e, preferred_element_type=jnp.float32)
            acc = acc + jnp.dot(lo, e, preferred_element_type=jnp.float32)
        o_ref[...] = acc.astype(o_ref.dtype)

    return kernel


# ---------------------------------------------------------------------------
# Tiling helpers
# ---------------------------------------------------------------------------
def _min_row_multiple(itemsize: int) -> int:
    # Sublane packing unit: f32 -> 8, bf16/f16 -> 16, int8/fp8 -> 32.
    return max(8, 32 // max(1, itemsize))


@functools.lru_cache(maxsize=1)
def _vmem_limit_bytes() -> int:
    """Scoped VMEM budget: ~half of physical (64 MiB v5e/v6e, 32 MiB v7x)."""
    try:
        cap = int(pltpu.get_tpu_info().vmem_capacity_bytes)
    except Exception:
        cap = 64 << 20  # conservative (v7x physical size)
    if cap <= 0:
        cap = 64 << 20
    return int(max(32 << 20, min(cap // 2, 96 << 20)))


def _pick_row_tile(rows: int, w_out: int, itemsize: int,
                   target_out_bytes: int, m: int) -> int:
    """Row tile: multiple of the packing unit, ~target_out_bytes of output,
    and at least two grid steps when possible (v7x has 2 TensorCores sharing
    the 'parallel' axis).  No exact-divisor search: the ragged last block is
    handled by Pallas boundary masking."""
    if rows <= m:
        return rows  # single block equal to the full row extent
    cap = max(1, target_out_bytes // max(1, w_out * itemsize))
    cap = min(cap, rows)
    r = max(m, (cap // m) * m)
    if rows >= 2 * m:
        half = (((rows + 1) // 2) // m) * m
        r = min(r, max(m, half))
    return r


# ---------------------------------------------------------------------------
# Wrapper
# ---------------------------------------------------------------------------
def upsample1d_nearest(x: jax.Array, scale_factor: int = 2,
                       mode: str = "nearest") -> jax.Array:
    """Pallas equivalent of nn.Upsample(scale_factor, mode='nearest') on (N,C,L)."""
    if mode != "nearest":
        # TODO(synk): only 'nearest' is implemented (no linear interpolation kernel).
        raise NotImplementedError("only mode='nearest' is implemented")
    scale = int(scale_factor)
    if scale != scale_factor or scale < 1:
        # TODO(synk): PyTorch also accepts non-integer scale factors.
        raise NotImplementedError("integer scale_factor >= 1 only")
    if scale == 1:
        return x

    N, C, L = x.shape
    L_out = L * scale
    rows = N * C
    dt = jnp.dtype(x.dtype)
    itemsize = dt.itemsize

    one_pass = dt == jnp.dtype(jnp.bfloat16)
    three_pass = dt in (jnp.dtype(jnp.float32), jnp.dtype(jnp.float16))
    # Keep the one-hot matmul below the HBM roofline (v5e is the tightest part).
    max_w_in = 512 if one_pass else 256

    # Fold g consecutive rows into the lane axis so the output width is a
    # multiple of 128 (unmasked lane-dense stores -- the biggest single lever).
    g = 1
    if L_out % 128 != 0:
        g_needed = 128 // math.gcd(L_out, 128)
        if rows % g_needed == 0 and g_needed * L <= max_w_in:
            g = g_needed
    rows_f, w_in, w_out = rows // g, g * L, g * L_out
    e_bytes = w_in * w_out * 2  # bf16 expansion matrix

    if not (one_pass or three_pass) or w_in > max_w_in or e_bytes > (2 << 20):
        # TODO(synk): integer / float64 dtypes and very long rows have no Pallas
        # path yet; fall back to XLA's own nearest repeat (mem-bound there too).
        return jnp.repeat(x, scale, axis=-1)

    x2 = x.reshape(rows_f, w_in)  # free, contiguous reshape in the wrapper

    m = _min_row_multiple(itemsize)
    vmem_limit = _vmem_limit_bytes()
    # Double-buffered in+out tiles plus 2x E must fit comfortably in VMEM.
    # 2*(out + out/scale) <= 3*out for scale >= 2.
    budget = int(0.4 * vmem_limit) - 2 * e_bytes
    target_out_bytes = max(512 << 10, min(8 << 20, budget // 3))
    R = _pick_row_tile(rows_f, w_out, itemsize, target_out_bytes, m)
    grid = (pl.cdiv(rows_f, R),)

    # Constant one-hot expansion matrix: E[i, j] = 1 iff j // scale == i.
    src = jnp.arange(w_out, dtype=jnp.int32) // scale
    e = (src[None, :] == jnp.arange(w_in, dtype=jnp.int32)[:, None]).astype(jnp.bfloat16)

    cost = pl.CostEstimate(
        flops=0,  # bandwidth-dominated; the one-hot matmul flops are incidental
        transcendentals=0,
        bytes_accessed=(rows * L + rows * L_out) * itemsize + e_bytes,
    )

    out2 = pl.pallas_call(
        _make_expand_kernel(1 if one_pass else 3),
        out_shape=jax.ShapeDtypeStruct((rows_f, w_out), x.dtype),
        grid=grid,
        in_specs=[
            pl.BlockSpec((R, w_in), lambda i: (i, 0)),
            pl.BlockSpec((w_in, w_out), lambda i: (0, 0)),  # fetched once, resident
        ],
        out_specs=pl.BlockSpec((R, w_out), lambda i: (i, 0)),
        compiler_params=pltpu.CompilerParams(
            dimension_semantics=("parallel",),
            vmem_limit_bytes=vmem_limit,
        ),
        cost_estimate=cost,
    )(x2, e)

    return out2.reshape(N, C, L_out)


if __name__ == "__main__":
    key = jax.random.PRNGKey(0)
    k0, k1, k2, k3 = jax.random.split(key, 4)

    # 1) Module-implied shape: (batch=2, channels=4, length=16), f32, scale=2.
    #    Exercises lane-folding (g=4 -> 128-wide output) and the exact f32 path.
    x = jax.random.normal(k0, (2, 4, 16), dtype=jnp.float32)
    out = jax.block_until_ready(upsample1d_nearest(x, scale_factor=2))
    ref = jnp.repeat(x, 2, axis=-1)
    assert out.shape == ref.shape and out.dtype == x.dtype
    assert bool(jnp.array_equal(out, ref)), "f32 mismatch (must be bit-exact)"

    # 2) bf16, single-pass MXU path, multi-step 'parallel' row grid (2 steps).
    xb = jax.random.normal(k1, (2, 16, 64), dtype=jnp.bfloat16)
    outb = jax.block_until_ready(upsample1d_nearest(xb, scale_factor=2))
    refb = jnp.repeat(xb, 2, axis=-1)
    assert outb.shape == refb.shape and outb.dtype == xb.dtype
    assert bool(jnp.array_equal(outb, refb)), "bf16 mismatch (must be exact)"

    # 3) rows below the packing unit, no folding possible, scale_factor=3.
    xs = jax.random.normal(k2, (1, 5, 16), dtype=jnp.float32)
    outs = jax.block_until_ready(upsample1d_nearest(xs, scale_factor=3))
    refs = jnp.repeat(xs, 3, axis=-1)
    assert outs.shape == refs.shape
    assert bool(jnp.array_equal(outs, refs)), "scale=3 mismatch"

    # 4) Ragged row count (21 rows, 8-row tiles -> 3 grid steps, masked tail).
    xr = jax.random.normal(k3, (3, 7, 64), dtype=jnp.float32)
    outr = jax.block_until_ready(upsample1d_nearest(xr, scale_factor=2))
    refr = jnp.repeat(xr, 2, axis=-1)
    assert outr.shape == refr.shape
    assert bool(jnp.array_equal(outr, refr)), "ragged-tail mismatch"

    print("KERNEL_OK")
</pallas_src>

<mosaic_0001>
module attributes {stable_mosaic.version = 11 : i64} {
  func.func @kernel(%arg0: i32, %arg1: memref<2x64xf32, #tpu.memory_space<vmem>>, %arg2: memref<64x128xbf16, #tpu.memory_space<vmem>>, %arg3: memref<2x128xf32, #tpu.memory_space<vmem>>) attributes {dimension_semantics = [#tpu.dimension_semantics<parallel>], iteration_bounds = array<i64: 1>, scalar_prefetch = 0 : i64, scratch_operands = 0 : i64, tpu.core_type = #tpu.core_type<tc>, window_params = [{transform_indices = @transform_0, window_bounds = array<i64: 2, 64>}, {pipeline_mode = #tpu.pipeline_mode<synchronous>, transform_indices = @transform_1, window_bounds = array<i64: 64, 128>}, {transform_indices = @transform_2, window_bounds = array<i64: 2, 128>}]} {
    %c0 = arith.constant 0 : index
    %c0_0 = arith.constant 0 : index
    %0 = vector.load %arg2[%c0, %c0_0] : memref<64x128xbf16, #tpu.memory_space<vmem>>, vector<64x128xbf16>
    %c0_1 = arith.constant 0 : index
    %c0_2 = arith.constant 0 : index
    %1 = vector.load %arg1[%c0_1, %c0_2] : memref<2x64xf32, #tpu.memory_space<vmem>>, vector<2x64xf32>
    %2 = arith.truncf %1 : vector<2x64xf32> to vector<2x64xbf16>
    %3 = arith.extf %2 : vector<2x64xbf16> to vector<2x64xf32>
    %4 = arith.subf %1, %3 : vector<2x64xf32>
    %5 = arith.truncf %4 : vector<2x64xf32> to vector<2x64xbf16>
    %6 = arith.extf %5 : vector<2x64xbf16> to vector<2x64xf32>
    %7 = arith.subf %4, %6 : vector<2x64xf32>
    %8 = arith.truncf %7 : vector<2x64xf32> to vector<2x64xbf16>
    %cst = arith.constant dense<0.000000e+00> : vector<2x128xf32>
    %9 = tpu.matmul %2, %0, %cst {dimension_numbers = #tpu.dot_dimension_numbers<[1], [0], [0], [1], [0, 0, 1, 1], [], []>} : vector<2x64xbf16>, vector<64x128xbf16>, vector<2x128xf32> -> vector<2x128xf32>
    %cst_3 = arith.constant dense<0.000000e+00> : vector<2x128xf32>
    %10 = tpu.matmul %5, %0, %cst_3 {dimension_numbers = #tpu.dot_dimension_numbers<[1], [0], [0], [1], [0, 0, 1, 1], [], []>} : vector<2x64xbf16>, vector<64x128xbf16>, vector<2x128xf32> -> vector<2x128xf32>
    %11 = arith.addf %9, %10 : vector<2x128xf32>
    %cst_4 = arith.constant dense<0.000000e+00> : vector<2x128xf32>
    %12 = tpu.matmul %8, %0, %cst_4 {dimension_numbers = #tpu.dot_dimension_numbers<[1], [0], [0], [1], [0, 0, 1, 1], [], []>} : vector<2x64xbf16>, vector<64x128xbf16>, vector<2x128xf32> -> vector<2x128xf32>
    %13 = arith.addf %11, %12 : vector<2x128xf32>
    %c0_5 = arith.constant 0 : index
    %c0_6 = arith.constant 0 : index
    %14 = vector.load %arg3[%c0_5, %c0_6] : memref<2x128xf32, #tpu.memory_space<vmem>>, vector<2x128xf32>
    tpu.vector_store %arg3[%c0_5, %c0_6], %13 {strides = array<i32>} : memref<2x128xf32, #tpu.memory_space<vmem>>, vector<2x128xf32>,
    return
  }
  func.func @transform_0(%arg0: i32) -> (i32, i32) {
    %c0_i32 = arith.constant 0 : i32
    %c0_i32_0 = arith.constant 0 : i32
    return %arg0, %c0_i32 : i32, i32
  }
  func.func @transform_1(%arg0: i32) -> (i32, i32) {
    %c0_i32 = arith.constant 0 : i32
    %c0_i32_0 = arith.constant 0 : i32
    %c0_i32_1 = arith.constant 0 : i32
    return %c0_i32, %c0_i32_0 : i32, i32
  }
  func.func @transform_2(%arg0: i32) -> (i32, i32) {
    %c0_i32 = arith.constant 0 : i32
    %c0_i32_0 = arith.constant 0 : i32
    return %arg0, %c0_i32 : i32, i32
  }
}

</mosaic_0001>

<llo_original>
// kernel: tpu_custom_call.1
$region0: #{tpu_custom_call.1}
  #allocation0 [shape = 'u32[]', space=smem, size = 0x4, offset = 0x4, fixed_abs, tag = 'smem constant byte address 0x4 - core index']
  #allocation1 [shape = 'u32[72,128]{1,0:T(1,128)}', space=vmem, size = 0x9000, scoped, tag = 'internal scratch']
  %s0 = inlined_call_operand.hbm [shape: f32[2,64], index: 0, kind: input, shape index: {}]
  %s1 = inlined_call_operand.hbm [shape: bf16[64,128], index: 1, kind: input, shape index: {}]
  %s2 = inlined_call_operand.hbm [shape: f32[2,128], index: 2, kind: output, shape index: {}]
  %s3 = sld [smem:[#allocation0]]
  $region26: #{tpu_custom_call.1} parent=0
    _
  %s5 = ssub.s32 1, %s3
  %s6 = scalar_select 0, %s5, %s3
  $region1: #{tpu_custom_call.1} parent=0
    #allocation2 [shape = 'u8[1024]{0}', space=vmem, size = 0x400, scoped, tag = 'input window, operand 0, single buffered']
    #allocation3 [shape = 's32[1]{0}', space=sflag, size = 0x4, scoped, tag = 'scoped memory for tpu_custom_call.1']
    #allocation4 [shape = 's32[1]{0}', space=sflag, size = 0x4, scoped, tag = 'scoped memory for tpu_custom_call.1']
    #allocation5 [shape = 'u8[16384]{0}', space=vmem, size = 0x4000, scoped, tag = 'input window, operand 1, single buffered']
    #allocation6 [shape = 's32[1]{0}', space=sflag, size = 0x4, scoped, tag = 'scoped memory for tpu_custom_call.1']
    #allocation7 [shape = 'u8[1024]{0}', space=vmem, size = 0x400, scoped, tag = 'output window, operand 0, single buffered']
    %7 = vsyncpa [#allocation3], 0
    %8 = vsyncpa [#allocation6], 0
    %9 = vsyncpa [#allocation4], 0
    // Predicated region
    $region2: #{tpu_custom_call.1} parent=1 // pred_check
      _
    $region3: #{tpu_custom_call.1} parent=1 // pred_check_branch
      %11 = sbr.rel (0) target = $region5
    $region4: #{tpu_custom_call.1} parent=1 // pred_region
      %13 = vsyncadd [#allocation3], 0
      %s15 = sshll.u32 %s0, 4
      %s16 = int_to_ptr.hbm [resolvable:$true] %s15
      %s17 = sshll.u32 [#allocation2], 4
      %s18 = int_to_ptr.vmem [resolvable:$true] %s17
      %20 = dma.hbm_to_vmem [thread:$0]  %s16, 32, %s18, [#allocation3]
    $region5: #{tpu_custom_call.1} parent=1 // pred_fallthru
      _
    // Predicated region
    $region6: #{tpu_custom_call.1} parent=1 // pred_check
      _
    $region7: #{tpu_custom_call.1} parent=1 // pred_check_branch
      %22 = sbr.rel (0) target = $region9
    $region8: #{tpu_custom_call.1} parent=1 // pred_region
      %24 = vsyncadd [#allocation6], 0
      %s25 = sshll.u32 %s1, 4
      %s26 = int_to_ptr.hbm [resolvable:$true] %s25
      %s27 = sshll.u32 [#allocation5], 4
      %s28 = int_to_ptr.vmem [resolvable:$true] %s27
      %33 = dma.hbm_to_vmem [thread:$0]  %s26, 512, %s28, [#allocation6], 64, 64, 4
    $region9: #{tpu_custom_call.1} parent=1 // pred_fallthru
      _
    // Predicated region
    $region10: #{tpu_custom_call.1} parent=1 // pred_check
      _
    $region11: #{tpu_custom_call.1} parent=1 // pred_check_branch
      %35 = sbr.rel (0) target = $region13
    $region12: #{tpu_custom_call.1} parent=1 // pred_region
      %37 = dma.done [#allocation3], 32
    $region13: #{tpu_custom_call.1} parent=1 // pred_fallthru
      _
    // Predicated region
    $region14: #{tpu_custom_call.1} parent=1 // pred_check
      _
    $region15: #{tpu_custom_call.1} parent=1 // pred_check_branch
      %39 = sbr.rel (0) target = $region17
    $region16: #{tpu_custom_call.1} parent=1 // pred_region
      %41 = dma.done [#allocation6], 512
    $region17: #{tpu_custom_call.1} parent=1 // pred_fallthru
      _
    %v43 = vld [vmem:[#allocation5] sm:$0xf]
    %v44 = vld [vmem:[#allocation5 + $0x4] sm:$0xf]
    %v45 = vld [vmem:[#allocation5 + $0x8] sm:$0xf]
    %v46 = vld [vmem:[#allocation5 + $0xc] sm:$0xf]
    %v47 = vld [vmem:[#allocation5 + $0x10] sm:$0xf]
    %v48 = vld [vmem:[#allocation5 + $0x14] sm:$0xf]
    %v49 = vld [vmem:[#allocation5 + $0x18] sm:$0xf]
    %v50 = vld [vmem:[#allocation5 + $0x1c] sm:$0xf]
    %v51 = vld [vmem:[#allocation2] sm:$0x3]
    %v52 = vpack.c.bf16 %v51, %v51
    %v53 = vunpack.c.l.bf16 %v52
    %v54 = vsub.f32 %v51, %v53
    %v55 = vpack.c.bf16 %v54, %v54
    %v56 = vunpack.c.l.bf16 %v55
    %v57 = vsub.f32 %v54, %v56
    %v58 = vpack.c.bf16 %v57, %v57
    %v67 = vunpack.c.l.b16 %v43
    %v68 = vunpack.c.l.b16 %v44
    %v69 = vunpack.c.l.b16 %v45
    %v70 = vunpack.c.l.b16 %v46
    %v71 = vunpack.c.l.b16 %v47
    %v72 = vunpack.c.l.b16 %v48
    %v73 = vunpack.c.l.b16 %v49
    %v74 = vunpack.c.l.b16 %v50
    %v75 = vpack.c.b16 %v68, %v67
    %v76 = vpack.c.b16 %v70, %v69
    %v77 = vpack.c.b16 %v72, %v71
    %v78 = vpack.c.b16 %v74, %v73
    %vm83 = vcmask 523264
    %v85 = vsel %vm83, %v55, 0
    %87 = vmatpush.bf16.msra.mxu0 0
    %88 = vmatpush.bf16.msra.mxu0 0
    %89 = vmatpush.bf16.msra.mxu0 0
    %90 = vmatpush.bf16.msra.mxu0 0
    %91 = vmatpush.bf16.msra.mxu0 %v78
    %92 = vmatpush.bf16.msra.mxu0 %v77
    %93 = vmatpush.bf16.msra.mxu0 %v76
    %94 = vmatpush.bf16.msra.mxu0 %v75
    %95 = vmatmul.bf16.gmra.mxu0 %v85
    %v96 = vpop.f32.mrf.mxu0
    %v97 = vadd.f32 0.0, %v96
    %v98 = vpop.f32.mrf.mxu0
    %99 = vdwg.mxu0
    %v101 = vsel %vm83, %v52, 0
    %103 = vmatpush.bf16.msra.mxu0 0
    %104 = vmatpush.bf16.msra.mxu0 0
    %105 = vmatpush.bf16.msra.mxu0 0
    %106 = vmatpush.bf16.msra.mxu0 0
    %107 = vmatpush.bf16.msra.mxu0 %v78
    %108 = vmatpush.bf16.msra.mxu0 %v77
    %109 = vmatpush.bf16.msra.mxu0 %v76
    %110 = vmatpush.bf16.msra.mxu0 %v75
    %111 = vmatmul.bf16.gmra.mxu0 %v101
    %v112 = vpop.f32.mrf.mxu0
    %v113 = vadd.f32 %v97, %v112
    %v114 = vpop.f32.mrf.mxu0
    %115 = vdwg.mxu0
    %v117 = vsel %vm83, %v58, 0
    %119 = vmatpush.bf16.msra.mxu0 0
    %120 = vmatpush.bf16.msra.mxu0 0
    %121 = vmatpush.bf16.msra.mxu0 0
    %122 = vmatpush.bf16.msra.mxu0 0
    %123 = vmatpush.bf16.msra.mxu0 %v78
    %124 = vmatpush.bf16.msra.mxu0 %v77
    %125 = vmatpush.bf16.msra.mxu0 %v76
    %126 = vmatpush.bf16.msra.mxu0 %v75
    %127 = vmatmul.bf16.gmra.mxu0 %v117
    %v128 = vpop.f32.mrf.mxu0
    %v129 = vadd.f32 0.0, %v128
    %v130 = vpop.f32.mrf.mxu0
    %131 = vdwg.mxu0
    %v132 = vadd.f32 %v113, %v129
    %133 = vst [vmem:[#allocation7] sm:$0x3] %v132
    // Predicated region
    $region18: #{tpu_custom_call.1} parent=1 // pred_check
      _
    $region19: #{tpu_custom_call.1} parent=1 // pred_check_branch
      %135 = sbr.rel (0) target = $region21
    $region20: #{tpu_custom_call.1} parent=1 // pred_region
      %137 = vsyncadd [#allocation4], 0
      %s139 = sshll.u32 [#allocation7], 4
      %s140 = int_to_ptr.vmem [resolvable:$true] %s139
      %s141 = sshll.u32 %s2, 4
      %s142 = int_to_ptr.hbm [resolvable:$true] %s141
      %144 = dma.vmem_to_hbm [thread:$0]  %s140, 32, %s142, [#allocation4]
    $region21: #{tpu_custom_call.1} parent=1 // pred_fallthru
      _
    // Predicated region
    $region22: #{tpu_custom_call.1} parent=1 // pred_check
      _
    $region23: #{tpu_custom_call.1} parent=1 // pred_check_branch
      %146 = sbr.rel (0) target = $region25
    $region24: #{tpu_custom_call.1} parent=1 // pred_region
      %148 = dma.done [#allocation4], 32
    $region25: #{tpu_custom_call.1} parent=1 // pred_fallthru
      _
    %149 = vsyncpa [#allocation3], 1
    %150 = vsyncpa [#allocation6], 1
    %151 = vsyncpa [#allocation4], 1

</llo_original>
